<compile_context>
chip_gen: v7x
topology: tpu7x:2x2x1
jax: 0.10.0
libtpu: 0.0.40
codegen_flags: <defaults>
</compile_context>

<pallas_src>
import functools

import jax
import jax.numpy as jnp
from jax.experimental import pallas as pl
from jax.experimental.pallas import tpu as pltpu


def channel_attention_kernel(x_ref, w1t_ref, w2t_ref, o_ref,
                             sum_ref, max_ref, *, inv_hw):
    """One (batch-block, spatial-block) step of ChannelAttention.

    x_ref:   (Nb, C, HWb) input tile (native dtype), lane-dense minor dim
    w1t_ref: (C, Cr)      fc1 weight, pre-transposed
    w2t_ref: (Cr, C)      fc2 weight, pre-transposed
    o_ref:   (Nb, C)      sigmoid(fc2(relu(fc1(avg))) + fc2(relu(fc1(max))))
    sum_ref: (Nb, C) f32  running spatial sum  (scratch)
    max_ref: (Nb, C) f32  running spatial max  (scratch)
    """
    h = pl.program_id(1)

    @pl.when(h == 0)
    def _init():
        sum_ref[...] = jnp.zeros_like(sum_ref)
        max_ref[...] = jnp.full_like(max_ref, -jnp.inf)

    x = x_ref[...]                                   # (Nb, C, HWb), native dtype
    # f32 accumulation fused into the lane reduce; the max stays in the input
    # dtype and only its (Nb, C) result is cast -- no full-block f32 temp.
    sum_ref[...] += jnp.sum(x, axis=-1, dtype=jnp.float32)
    max_ref[...] = jnp.maximum(max_ref[...],
                               jnp.max(x, axis=-1).astype(jnp.float32))

    @pl.when(h == pl.num_programs(1) - 1)
    def _finalize():
        nb = sum_ref.shape[0]
        avg = sum_ref[...] * inv_hw                              # (Nb, C)
        # Fused shared MLP: avg- and max-pooled rows in one pair of MXU dots.
        pooled = jnp.concatenate([avg, max_ref[...]], axis=0)    # (2*Nb, C)
        z = jnp.dot(pooled, w1t_ref[...],
                    preferred_element_type=jnp.float32)          # fc1
        z = jnp.maximum(z, 0.0)                                  # ReLU
        y = jnp.dot(z, w2t_ref[...],
                    preferred_element_type=jnp.float32)          # fc2
        o_ref[...] = jax.nn.sigmoid(y[:nb] + y[nb:]).astype(o_ref.dtype)


# Per-buffer input-block budget (double-buffered => ~2x this resident).
# ~8 MiB keeps the pipeline in the high-efficiency regime on v6e/v7x while the
# explicit vmem_limit_bytes below keeps v5e's scoped limit honest.
_BLOCK_BUDGET = 8 * 1024 * 1024


def _pick_block_hw(HW, C, n_min, itemsize, budget=_BLOCK_BUDGET):
    """Spatial positions per grid step.  Full HW unless even an n_min-sample
    block would blow the budget; then a 128-multiple divisor of HW so no
    masking of partial spatial blocks is ever needed."""
    if n_min * C * HW * itemsize <= budget:
        return HW
    target = max(128, budget // max(1, n_min * C * itemsize))
    fit, smallest_over = None, None
    d = 128
    while d <= HW:
        if HW % d == 0:
            if d <= target:
                fit = d
            elif smallest_over is None:
                smallest_over = d
        d += 128
    if fit is not None:
        return fit
    if smallest_over is not None:
        return smallest_over
    return HW  # no 128-multiple divisor: keep the lane dim whole (correct, just bigger)


def _pick_block_n(N, C, hw_block, itemsize, budget=_BLOCK_BUDGET):
    """Samples per grid step (multiple of 8; batch tiled with pl.cdiv).
    Blocks are kept >= ~1 MiB to amortize the ~0.35us/step overhead while
    leaving several grid steps for DMA/compute pipelining and the v7x
    two-TensorCore split of the 'parallel' batch axis."""
    if N < 8:
        return N
    per_sample = max(1, C * hw_block * itemsize)
    ideal = min(budget, max(1 << 20, (N * per_sample) // 4))   # aim for >= ~4 steps
    nb = max(8, (ideal // per_sample) // 8 * 8)
    return min(nb, (N // 8) * 8)


def channel_attention_forward(x, w1, w2, *, block_n=None, block_hw=None):
    """x: (N, C, H, W); w1 = fc1.weight[:, :, 0, 0] (Cr, C); w2 = fc2.weight[:, :, 0, 0] (C, Cr).

    Returns the channel-attention map of shape (N, C, 1, 1) (PyTorch semantics).
    """
    N, C, H, W = x.shape
    Cr = w1.shape[0]
    HW = H * W
    itemsize = jnp.dtype(x.dtype).itemsize

    # Lane-dense layout: collapse spatial dims into one minor axis; keep x in
    # its native dtype end-to-end (bf16 halves HBM bytes on this mem-bound op).
    x2 = x.reshape(N, C, HW)
    w1t = jnp.transpose(w1).astype(jnp.float32)      # (C, Cr)
    w2t = jnp.transpose(w2).astype(jnp.float32)      # (Cr, C)

    if block_hw is None:
        block_hw = _pick_block_hw(HW, C, min(N, 8), itemsize)
    if block_n is None:
        block_n = _pick_block_n(N, C, block_hw, itemsize)

    grid = (pl.cdiv(N, block_n), pl.cdiv(HW, block_hw))

    # Actual VMEM residency: double-buffered input/weights/output + f32 accumulators.
    resident = (2 * block_n * C * block_hw * itemsize
                + 2 * 2 * C * Cr * 4
                + 2 * block_n * C * itemsize
                + 2 * block_n * C * 4)
    vmem_limit = int(min(64 << 20, max(32 << 20, 2 * resident)))

    kernel = functools.partial(channel_attention_kernel, inv_hw=1.0 / HW)

    out2 = pl.pallas_call(
        kernel,
        out_shape=jax.ShapeDtypeStruct((N, C), x.dtype),
        grid=grid,
        in_specs=[
            pl.BlockSpec((block_n, C, block_hw), lambda b, h: (b, 0, h)),
            pl.BlockSpec((C, Cr), lambda b, h: (0, 0)),
            pl.BlockSpec((Cr, C), lambda b, h: (0, 0)),
        ],
        out_specs=pl.BlockSpec((block_n, C), lambda b, h: (b, 0)),
        scratch_shapes=[
            pltpu.VMEM((block_n, C), jnp.float32),   # running spatial sum
            pltpu.VMEM((block_n, C), jnp.float32),   # running spatial max
        ],
        compiler_params=pltpu.CompilerParams(
            # batch blocks are independent -> shard across v7x TensorCores;
            # the spatial axis carries the accumulator -> "arbitrary".
            dimension_semantics=("parallel", "arbitrary"),
            vmem_limit_bytes=vmem_limit,
        ),
    )(x2, w1t, w2t)
    return out2.reshape(N, C, 1, 1)


def channel_attention_reference(x, w1, w2):
    """Pure-JAX reference matching the PyTorch ChannelAttention module."""
    avg = jnp.mean(x, axis=(2, 3))                          # (N, C)
    mx = jnp.max(x, axis=(2, 3))                            # (N, C)

    def mlp(v):
        return jax.nn.relu(v @ w1.T) @ w2.T                 # fc2(relu(fc1(v)))

    return jax.nn.sigmoid(mlp(avg) + mlp(mx))[:, :, None, None]


if __name__ == "__main__":
    key = jax.random.PRNGKey(0)

    # Small shapes consistent with the module (ratio=8 -> C // ratio >= 1).
    N, C, H, W, ratio = 2, 64, 16, 16, 8
    Cr = C // ratio
    k1, k2, k3, k4 = jax.random.split(key, 4)
    x = jax.random.normal(k1, (N, C, H, W), jnp.float32)
    # PyTorch Conv2d(C, Cr, 1, bias=False).weight is (Cr, C, 1, 1); 1x1 dims dropped.
    w1 = jax.random.normal(k2, (Cr, C), jnp.float32) * 0.3
    w2 = jax.random.normal(k3, (C, Cr), jnp.float32) * 0.3

    out = jax.block_until_ready(jax.jit(channel_attention_forward)(x, w1, w2))
    ref = channel_attention_reference(x, w1, w2)
    assert out.shape == (N, C, 1, 1)
    err = float(jnp.max(jnp.abs(out - ref)))
    assert jnp.allclose(out, ref, atol=2e-5, rtol=1e-5), f"max abs err = {err}"

    # Second check: multi-step batch grid + bf16 input (exercises the
    # accumulator init/finalize path and the dtype-fused reduce).
    N2 = 64
    x_bf = jax.random.normal(k4, (N2, C, H, W), jnp.bfloat16)
    out_bf = jax.block_until_ready(jax.jit(channel_attention_forward)(x_bf, w1, w2))
    ref_bf = channel_attention_reference(x_bf.astype(jnp.float32), w1, w2)
    assert out_bf.shape == (N2, C, 1, 1)
    err_bf = float(jnp.max(jnp.abs(out_bf.astype(jnp.float32) - ref_bf)))
    assert err_bf < 2e-2, f"bf16 max abs err = {err_bf}"

    print("KERNEL_OK")
</pallas_src>

<mosaic_0001>
module attributes {stable_mosaic.version = 11 : i64} {
  func.func @channel_attention_kernel(%arg0: i32, %arg1: i32, %arg2: memref<2x64x256xf32, #tpu.memory_space<vmem>>, %arg3: memref<64x8xf32, #tpu.memory_space<vmem>>, %arg4: memref<8x64xf32, #tpu.memory_space<vmem>>, %arg5: memref<2x64xf32, #tpu.memory_space<vmem>>, %arg6: memref<2x64xf32, #tpu.memory_space<vmem>>, %arg7: memref<2x64xf32, #tpu.memory_space<vmem>>) attributes {dimension_semantics = [#tpu.dimension_semantics<parallel>, #tpu.dimension_semantics<arbitrary>], iteration_bounds = array<i64: 1, 1>, scalar_prefetch = 0 : i64, scratch_operands = 2 : i64, tpu.core_type = #tpu.core_type<tc>, window_params = [{transform_indices = @transform_0, window_bounds = array<i64: 2, 64, 256>}, {pipeline_mode = #tpu.pipeline_mode<synchronous>, transform_indices = @transform_1, window_bounds = array<i64: 64, 8>}, {pipeline_mode = #tpu.pipeline_mode<synchronous>, transform_indices = @transform_2, window_bounds = array<i64: 8, 64>}, {transform_indices = @transform_3, window_bounds = array<i64: 2, 64>}]} {
    %c0_i32 = arith.constant 0 : i32
    %0 = arith.cmpi eq, %arg1, %c0_i32 : i32
    %1 = arith.extui %0 : i1 to i32
    %c0_i32_0 = arith.constant 0 : i32
    %2 = arith.cmpi ne, %1, %c0_i32_0 : i32
    scf.if %2 {
      %cst_14 = arith.constant 0.000000e+00 : f32
      %15 = vector.broadcast %cst_14 : f32 to vector<2x64xf32>
      %c0_15 = arith.constant 0 : index
      %c0_16 = arith.constant 0 : index
      %16 = vector.load %arg6[%c0_15, %c0_16] : memref<2x64xf32, #tpu.memory_space<vmem>>, vector<2x64xf32>
      tpu.vector_store %arg6[%c0_15, %c0_16], %15 {strides = array<i32>} : memref<2x64xf32, #tpu.memory_space<vmem>>, vector<2x64xf32>,
      %cst_17 = arith.constant 0xFF800000 : f32
      %17 = vector.broadcast %cst_17 : f32 to vector<2x64xf32>
      %c0_18 = arith.constant 0 : index
      %c0_19 = arith.constant 0 : index
      %18 = vector.load %arg7[%c0_18, %c0_19] : memref<2x64xf32, #tpu.memory_space<vmem>>, vector<2x64xf32>
      tpu.vector_store %arg7[%c0_18, %c0_19], %17 {strides = array<i32>} : memref<2x64xf32, #tpu.memory_space<vmem>>, vector<2x64xf32>,
    } else {
    }
    %c0 = arith.constant 0 : index
    %c0_1 = arith.constant 0 : index
    %c0_2 = arith.constant 0 : index
    %3 = vector.load %arg2[%c0, %c0_1, %c0_2] : memref<2x64x256xf32, #tpu.memory_space<vmem>>, vector<2x64x256xf32>
    %c0_3 = arith.constant 0 : index
    %c0_4 = arith.constant 0 : index
    %4 = vector.load %arg6[%c0_3, %c0_4] : memref<2x64xf32, #tpu.memory_space<vmem>>, vector<2x64xf32>
    %cst = arith.constant dense<0.000000e+00> : vector<2x64xf32>
    %5 = vector.multi_reduction <add>, %3, %cst [2] : vector<2x64x256xf32> to vector<2x64xf32>
    %6 = arith.addf %4, %5 : vector<2x64xf32>
    %c0_5 = arith.constant 0 : index
    %c0_6 = arith.constant 0 : index
    %7 = vector.load %arg6[%c0_5, %c0_6] : memref<2x64xf32, #tpu.memory_space<vmem>>, vector<2x64xf32>
    tpu.vector_store %arg6[%c0_5, %c0_6], %6 {strides = array<i32>} : memref<2x64xf32, #tpu.memory_space<vmem>>, vector<2x64xf32>,
    %c0_7 = arith.constant 0 : index
    %c0_8 = arith.constant 0 : index
    %8 = vector.load %arg7[%c0_7, %c0_8] : memref<2x64xf32, #tpu.memory_space<vmem>>, vector<2x64xf32>
    %cst_9 = arith.constant dense<0xFF800000> : vector<2x64xf32>
    %9 = vector.multi_reduction <maximumf>, %3, %cst_9 [2] : vector<2x64x256xf32> to vector<2x64xf32>
    %10 = arith.maximumf %8, %9 : vector<2x64xf32>
    %c0_10 = arith.constant 0 : index
    %c0_11 = arith.constant 0 : index
    %11 = vector.load %arg7[%c0_10, %c0_11] : memref<2x64xf32, #tpu.memory_space<vmem>>, vector<2x64xf32>
    tpu.vector_store %arg7[%c0_10, %c0_11], %10 {strides = array<i32>} : memref<2x64xf32, #tpu.memory_space<vmem>>, vector<2x64xf32>,
    %c0_i32_12 = arith.constant 0 : i32
    %12 = arith.cmpi eq, %arg1, %c0_i32_12 : i32
    %13 = arith.extui %12 : i1 to i32
    %c0_i32_13 = arith.constant 0 : i32
    %14 = arith.cmpi ne, %13, %c0_i32_13 : i32
    scf.if %14 {
      %c0_14 = arith.constant 0 : index
      %c0_15 = arith.constant 0 : index
      %15 = vector.load %arg6[%c0_14, %c0_15] : memref<2x64xf32, #tpu.memory_space<vmem>>, vector<2x64xf32>
      %cst_16 = arith.constant 3.906250e-03 : f32
      %16 = vector.broadcast %cst_16 : f32 to vector<2x64xf32>
      %17 = arith.mulf %15, %16 : vector<2x64xf32>
      %c0_17 = arith.constant 0 : index
      %c0_18 = arith.constant 0 : index
      %18 = vector.load %arg7[%c0_17, %c0_18] : memref<2x64xf32, #tpu.memory_space<vmem>>, vector<2x64xf32>
      %19 = tpu.concatenate %17, %18 in 0 : vector<2x64xf32>, vector<2x64xf32> -> vector<4x64xf32>
      %c0_19 = arith.constant 0 : index
      %c0_20 = arith.constant 0 : index
      %20 = vector.load %arg3[%c0_19, %c0_20] : memref<64x8xf32, #tpu.memory_space<vmem>>, vector<64x8xf32>
      %cst_21 = arith.constant dense<0.000000e+00> : vector<4x8xf32>
      %21 = tpu.matmul %19, %20, %cst_21 {dimension_numbers = #tpu.dot_dimension_numbers<[1], [0], [0], [1], [0, 0, 1, 1], [], []>} : vector<4x64xf32>, vector<64x8xf32>, vector<4x8xf32> -> vector<4x8xf32>
      %cst_22 = arith.constant 0.000000e+00 : f32
      %22 = vector.broadcast %cst_22 : f32 to vector<4x8xf32>
      %23 = arith.maximumf %21, %22 : vector<4x8xf32>
      %c0_23 = arith.constant 0 : index
      %c0_24 = arith.constant 0 : index
      %24 = vector.load %arg4[%c0_23, %c0_24] : memref<8x64xf32, #tpu.memory_space<vmem>>, vector<8x64xf32>
      %cst_25 = arith.constant dense<0.000000e+00> : vector<4x64xf32>
      %25 = tpu.matmul %23, %24, %cst_25 {dimension_numbers = #tpu.dot_dimension_numbers<[1], [0], [0], [1], [0, 0, 1, 1], [], []>} : vector<4x8xf32>, vector<8x64xf32>, vector<4x64xf32> -> vector<4x64xf32>
      %26 = vector.extract_strided_slice %25 {offsets = [0, 0], sizes = [2, 64], strides = [1, 1]} : vector<4x64xf32> to vector<2x64xf32>
      %27 = vector.extract_strided_slice %25 {offsets = [2, 0], sizes = [2, 64], strides = [1, 1]} : vector<4x64xf32> to vector<2x64xf32>
      %28 = arith.addf %26, %27 : vector<2x64xf32>
      %29 = arith.negf %28 : vector<2x64xf32>
      %30 = math.exp %29 : vector<2x64xf32>
      %cst_26 = arith.constant 1.000000e+00 : f32
      %31 = vector.broadcast %cst_26 : f32 to vector<2x64xf32>
      %32 = arith.addf %31, %30 : vector<2x64xf32>
      %33 = arith.divf %31, %32 : vector<2x64xf32>
      %c0_27 = arith.constant 0 : index
      %c0_28 = arith.constant 0 : index
      %34 = vector.load %arg5[%c0_27, %c0_28] : memref<2x64xf32, #tpu.memory_space<vmem>>, vector<2x64xf32>
      tpu.vector_store %arg5[%c0_27, %c0_28], %33 {strides = array<i32>} : memref<2x64xf32, #tpu.memory_space<vmem>>, vector<2x64xf32>,
    } else {
    }
    return
  }
  func.func @transform_0(%arg0: i32, %arg1: i32) -> (i32, i32, i32) {
    %c0_i32 = arith.constant 0 : i32
    %c0_i32_0 = arith.constant 0 : i32
    return %arg0, %c0_i32, %arg1 : i32, i32, i32
  }
  func.func @transform_1(%arg0: i32, %arg1: i32) -> (i32, i32) {
    %c0_i32 = arith.constant 0 : i32
    %c0_i32_0 = arith.constant 0 : i32
    %c0_i32_1 = arith.constant 0 : i32
    return %c0_i32, %c0_i32_0 : i32, i32
  }
  func.func @transform_2(%arg0: i32, %arg1: i32) -> (i32, i32) {
    %c0_i32 = arith.constant 0 : i32
    %c0_i32_0 = arith.constant 0 : i32
    %c0_i32_1 = arith.constant 0 : i32
    return %c0_i32, %c0_i32_0 : i32, i32
  }
  func.func @transform_3(%arg0: i32, %arg1: i32) -> (i32, i32) {
    %c0_i32 = arith.constant 0 : i32
    %c0_i32_0 = arith.constant 0 : i32
    return %arg0, %c0_i32 : i32, i32
  }
}

</mosaic_0001>

<llo_original>
// kernel: channel_attention_forward.1
$region0: #{channel_attention_forward.1}
  #allocation0 [shape = 'u32[]', space=smem, size = 0x4, offset = 0x4, fixed_abs, tag = 'smem constant byte address 0x4 - core index']
  #allocation1 [shape = 'u32[144,128]{1,0:T(1,128)}', space=vmem, size = 0x12000, scoped, tag = 'internal scratch']
  #allocation2 [shape = 'f32[2,64]{1,0:T(2,128)}', space=vmem, size = 0x400, scoped, tag = 'scratch operand']
  #allocation3 [shape = 'f32[2,64]{1,0:T(2,128)}', space=vmem, size = 0x400, scoped, tag = 'scratch operand']
  %s0 = inlined_call_operand.vmem [shape: f32[2,64,256], index: 0, kind: input, shape index: {}]
  %s1 = inlined_call_operand.vmem [shape: f32[64,8], index: 1, kind: input, shape index: {}]
  %s2 = inlined_call_operand.vmem [shape: f32[8,64], index: 2, kind: input, shape index: {}]
  %s3 = inlined_call_operand.hbm [shape: f32[2,64], index: 3, kind: output, shape index: {}]
  %s4 = sld [smem:[#allocation0]]
  $region30: #{channel_attention_forward.1} parent=0
    _
  %s6 = ssub.s32 1, %s4
  %s7 = scalar_select 0, %s6, %s4
  $region1: #{channel_attention_forward.1} parent=0
    #allocation4 [shape = 'u8[1024]{0}', space=vmem, size = 0x400, scoped, tag = 'output window, operand 0, single buffered']
    #allocation5 [shape = 's32[1]{0}', space=sflag, size = 0x4, scoped, tag = 'scoped memory for channel_attention_forward.1']
    %8 = vsyncpa [#allocation5], 0
    // Predicated region
    $region2: #{channel_attention_forward.1} parent=1 // pred_check
      _
    $region3: #{channel_attention_forward.1} parent=1 // pred_check_branch
      %10 = sbr.rel (0) target = $region5
    $region4: #{channel_attention_forward.1} parent=1 // pred_region
      _
    $region5: #{channel_attention_forward.1} parent=1 // pred_fallthru
      _
    // Predicated region
    $region6: #{channel_attention_forward.1} parent=1 // pred_check
      _
    $region7: #{channel_attention_forward.1} parent=1 // pred_check_branch
      %12 = sbr.rel (0) target = $region9
    $region8: #{channel_attention_forward.1} parent=1 // pred_region
      _
    $region9: #{channel_attention_forward.1} parent=1 // pred_fallthru
      _
    // Predicated region
    $region10: #{channel_attention_forward.1} parent=1 // pred_check
      _
    $region11: #{channel_attention_forward.1} parent=1 // pred_check_branch
      %14 = sbr.rel (0) target = $region13
    $region12: #{channel_attention_forward.1} parent=1 // pred_region
      _
    $region13: #{channel_attention_forward.1} parent=1 // pred_fallthru
      _
    %p15 = scmp.eq.s32.totalorder 0, 0
    // Predicated region
    $region14: #{channel_attention_forward.1} parent=1 // pred_check
      %p16 = pneg %p15
    $region15: #{channel_attention_forward.1} parent=1 // pred_check_branch
      %18 = sbr.rel (%p16) target = $region17
    $region16: #{channel_attention_forward.1} parent=1 // pred_region
      %vm19 = vcmask 517120
      %20 = vst.msk [vmem:[#allocation2] sm:$0x3] %vm19, 0.0
      %21 = vst.msk [vmem:[#allocation3] sm:$0x3] %vm19, -inf
    $region17: #{channel_attention_forward.1} parent=1 // pred_fallthru
      _
    %v22 = vld [vmem:[%s0] sm:$0xff]
    %v23 = vld [vmem:[%s0 + $0x8] sm:$0xff]
    %v24 = vld [vmem:[%s0 + $0x10] sm:$0xff]
    %v25 = vld [vmem:[%s0 + $0x18] sm:$0xff]
    %v26 = vld [vmem:[%s0 + $0x20] sm:$0xff]
    %v27 = vld [vmem:[%s0 + $0x28] sm:$0xff]
    %v28 = vld [vmem:[%s0 + $0x30] sm:$0xff]
    %v29 = vld [vmem:[%s0 + $0x38] sm:$0xff]
    %v30 = vld [vmem:[%s0 + $0x40] sm:$0xff]
    %v31 = vld [vmem:[%s0 + $0x48] sm:$0xff]
    %v32 = vld [vmem:[%s0 + $0x50] sm:$0xff]
    %v33 = vld [vmem:[%s0 + $0x58] sm:$0xff]
    %v34 = vld [vmem:[%s0 + $0x60] sm:$0xff]
    %v35 = vld [vmem:[%s0 + $0x68] sm:$0xff]
    %v36 = vld [vmem:[%s0 + $0x70] sm:$0xff]
    %v37 = vld [vmem:[%s0 + $0x78] sm:$0xff]
    %v38 = vld [vmem:[%s0 + $0x80] sm:$0xff]
    %v39 = vld [vmem:[%s0 + $0x88] sm:$0xff]
    %v40 = vld [vmem:[%s0 + $0x90] sm:$0xff]
    %v41 = vld [vmem:[%s0 + $0x98] sm:$0xff]
    %v42 = vld [vmem:[%s0 + $0xa0] sm:$0xff]
    %v43 = vld [vmem:[%s0 + $0xa8] sm:$0xff]
    %v44 = vld [vmem:[%s0 + $0xb0] sm:$0xff]
    %v45 = vld [vmem:[%s0 + $0xb8] sm:$0xff]
    %v46 = vld [vmem:[%s0 + $0xc0] sm:$0xff]
    %v47 = vld [vmem:[%s0 + $0xc8] sm:$0xff]
    %v48 = vld [vmem:[%s0 + $0xd0] sm:$0xff]
    %v49 = vld [vmem:[%s0 + $0xd8] sm:$0xff]
    %v50 = vld [vmem:[%s0 + $0xe0] sm:$0xff]
    %v51 = vld [vmem:[%s0 + $0xe8] sm:$0xff]
    %v52 = vld [vmem:[%s0 + $0xf0] sm:$0xff]
    %v53 = vld [vmem:[%s0 + $0xf8] sm:$0xff]
    %v54 = vld [vmem:[#allocation2] sm:$0x3]
    %v55 = vadd.f32 %v22, %v23
    %56 = vadd.xlane.f32.xlu0 %v55
    %v57 = vpop.xlane.xlu0 %56
    %v58 = vadd.f32 %v24, %v25
    %59 = vadd.xlane.f32.xlu0 %v58
    %v60 = vpop.xlane.xlu0 %59
    %v61 = vadd.f32 %v26, %v27
    %62 = vadd.xlane.f32.xlu0 %v61
    %v63 = vpop.xlane.xlu0 %62
    %v64 = vadd.f32 %v28, %v29
    %65 = vadd.xlane.f32.xlu0 %v64
    %v66 = vpop.xlane.xlu0 %65
    %v67 = vadd.f32 %v30, %v31
    %68 = vadd.xlane.f32.xlu0 %v67
    %v69 = vpop.xlane.xlu0 %68
    %v70 = vadd.f32 %v32, %v33
    %71 = vadd.xlane.f32.xlu0 %v70
    %v72 = vpop.xlane.xlu0 %71
    %v73 = vadd.f32 %v34, %v35
    %74 = vadd.xlane.f32.xlu0 %v73
    %v75 = vpop.xlane.xlu0 %74
    %v76 = vadd.f32 %v36, %v37
    %77 = vadd.xlane.f32.xlu0 %v76
    %v78 = vpop.xlane.xlu0 %77
    %v79 = vadd.f32 %v38, %v39
    %80 = vadd.xlane.f32.xlu0 %v79
    %v81 = vpop.xlane.xlu0 %80
    %v82 = vadd.f32 %v40, %v41
    %83 = vadd.xlane.f32.xlu0 %v82
    %v84 = vpop.xlane.xlu0 %83
    %v85 = vadd.f32 %v42, %v43
    %86 = vadd.xlane.f32.xlu0 %v85
    %v87 = vpop.xlane.xlu0 %86
    %v88 = vadd.f32 %v44, %v45
    %89 = vadd.xlane.f32.xlu0 %v88
    %v90 = vpop.xlane.xlu0 %89
    %v91 = vadd.f32 %v46, %v47
    %92 = vadd.xlane.f32.xlu0 %v91
    %v93 = vpop.xlane.xlu0 %92
    %v94 = vadd.f32 %v48, %v49
    %95 = vadd.xlane.f32.xlu0 %v94
    %v96 = vpop.xlane.xlu0 %95
    %v97 = vadd.f32 %v50, %v51
    %98 = vadd.xlane.f32.xlu0 %v97
    %v99 = vpop.xlane.xlu0 %98
    %v100 = vadd.f32 %v52, %v53
    %101 = vadd.xlane.f32.xlu0 %v100
    %v102 = vpop.xlane.xlu0 %101
    %v119 = vlaneseq
    %v120 = vand.u32 %v119, 127
    %v121 = vlaneseq
    %v122 = vshrl.u32 %v121, 7
    %v123 = vsub.s32 %v120, %v122
    %v124 = vrot.slane %v57, %v123
    %v125 = vadd.s32 %v120, 4294967288
    %v126 = vlaneseq
    %v127 = vshrl.u32 %v126, 7
    %v128 = vsub.s32 %v125, %v127
    %v129 = vrot.slane %v60, %v128
    %vm130 = vcmask 130112
    %v131 = vsel %vm130, %v129, %v124
    %v132 = vadd.s32 %v120, 4294967280
    %v133 = vlaneseq
    %v134 = vshrl.u32 %v133, 7
    %v135 = vsub.s32 %v132, %v134
    %v136 = vrot.slane %v63, %v135
    %vm137 = vcmask 195712
    %v138 = vsel %vm137, %v136, %v131
    %v139 = vadd.s32 %v120, 4294967272
    %v140 = vlaneseq
    %v141 = vshrl.u32 %v140, 7
    %v142 = vsub.s32 %v139, %v141
    %v143 = vrot.slane %v66, %v142
    %vm144 = vcmask 261312
    %v145 = vsel %vm144, %v143, %v138
    %v146 = vadd.s32 %v120, 4294967264
    %v147 = vlaneseq
    %v148 = vshrl.u32 %v147, 7
    %v149 = vsub.s32 %v146, %v148
    %v150 = vrot.slane %v69, %v149
    %vm151 = vcmask 326912
    %v152 = vsel %vm151, %v150, %v145
    %v153 = vadd.s32 %v120, 4294967256
    %v154 = vlaneseq
    %v155 = vshrl.u32 %v154, 7
    %v156 = vsub.s32 %v153, %v155
    %v157 = vrot.slane %v72, %v156
    %vm158 = vcmask 392512
    %v159 = vsel %vm158, %v157, %v152
    %v160 = vadd.s32 %v120, 4294967248
    %v161 = vlaneseq
    %v162 = vshrl.u32 %v161, 7
    %v163 = vsub.s32 %v160, %v162
    %v164 = vrot.slane %v75, %v163
    %vm165 = vcmask 458112
    %v166 = vsel %vm165, %v164, %v159
    %v167 = vadd.s32 %v120, 4294967240
    %v168 = vlaneseq
    %v169 = vshrl.u32 %v168, 7
    %v170 = vsub.s32 %v167, %v169
    %v171 = vrot.slane %v78, %v170
    %vm172 = vcmask 523712
    %v173 = vsel %vm172, %v171, %v166
    %v174 = vlaneseq
    %v175 = vshrl.u32 %v174, 7
    %v176 = vsub.s32 %v120, %v175
    %v177 = vrot.slane %v81, %v176
    %v178 = vlaneseq
    %v179 = vshrl.u32 %v178, 7
    %v180 = vsub.s32 %v125, %v179
    %v181 = vrot.slane %v84, %v180
    %v182 = vsel %vm130, %v181, %v177
    %v183 = vlaneseq
    %v184 = vshrl.u32 %v183, 7
    %v185 = vsub.s32 %v132, %v184
    %v186 = vrot.slane %v87, %v185
    %v187 = vsel %vm137, %v186, %v182
    %v188 = vlaneseq
    %v189 = vshrl.u32 %v188, 7
    %v190 = vsub.s32 %v139, %v189
    %v191 = vrot.slane %v90, %v190
    %v192 = vsel %vm144, %v191, %v187
    %v193 = vlaneseq
    %v194 = vshrl.u32 %v193, 7
    %v195 = vsub.s32 %v146, %v194
    %v196 = vrot.slane %v93, %v195
    %v197 = vsel %vm151, %v196, %v192
    %v198 = vlaneseq
    %v199 = vshrl.u32 %v198, 7
    %v200 = vsub.s32 %v153, %v199
    %v201 = vrot.slane %v96, %v200
    %v202 = vsel %vm158, %v201, %v197
    %v203 = vlaneseq
    %v204 = vshrl.u32 %v203, 7
    %v205 = vsub.s32 %v160, %v204
    %v206 = vrot.slane %v99, %v205
    %v207 = vsel %vm165, %v206, %v202
    %v208 = vlaneseq
    %v209 = vshrl.u32 %v208, 7
    %v210 = vsub.s32 %v167, %v209
    %v211 = vrot.slane %v102, %v210
    %v212 = vsel %vm172, %v211, %v207
    %vm213 = vcmask 1041409
    %v214 = vsel %vm213, %v212, %v173
    %v216 = vadd.f32 %v54, %v214
    %vm217 = vcmask 517120
    %218 = vst.msk [vmem:[#allocation2] sm:$0x3] %vm217, %v216
    %v219 = vld [vmem:[#allocation3] sm:$0x3]
    %v220 = vmax.f32 %v22, %v23
    %221 = vmax.xlane.f32.xlu0 %v220
    %v222 = vpop.xlane.xlu0 %221
    %v223 = vmax.f32 %v24, %v25
    %224 = vmax.xlane.f32.xlu0 %v223
    %v225 = vpop.xlane.xlu0 %224
    %v226 = vmax.f32 %v26, %v27
    %227 = vmax.xlane.f32.xlu0 %v226
    %v228 = vpop.xlane.xlu0 %227
    %v229 = vmax.f32 %v28, %v29
    %230 = vmax.xlane.f32.xlu0 %v229
    %v231 = vpop.xlane.xlu0 %230
    %v232 = vmax.f32 %v30, %v31
    %233 = vmax.xlane.f32.xlu0 %v232
    %v234 = vpop.xlane.xlu0 %233
    %v235 = vmax.f32 %v32, %v33
    %236 = vmax.xlane.f32.xlu0 %v235
    %v237 = vpop.xlane.xlu0 %236
    %v238 = vmax.f32 %v34, %v35
    %239 = vmax.xlane.f32.xlu0 %v238
    %v240 = vpop.xlane.xlu0 %239
    %v241 = vmax.f32 %v36, %v37
    %242 = vmax.xlane.f32.xlu0 %v241
    %v243 = vpop.xlane.xlu0 %242
    %v244 = vmax.f32 %v38, %v39
    %245 = vmax.xlane.f32.xlu0 %v244
    %v246 = vpop.xlane.xlu0 %245
    %v247 = vmax.f32 %v40, %v41
    %248 = vmax.xlane.f32.xlu0 %v247
    %v249 = vpop.xlane.xlu0 %248
    %v250 = vmax.f32 %v42, %v43
    %251 = vmax.xlane.f32.xlu0 %v250
    %v252 = vpop.xlane.xlu0 %251
    %v253 = vmax.f32 %v44, %v45
    %254 = vmax.xlane.f32.xlu0 %v253
    %v255 = vpop.xlane.xlu0 %254
    %v256 = vmax.f32 %v46, %v47
    %257 = vmax.xlane.f32.xlu0 %v256
    %v258 = vpop.xlane.xlu0 %257
    %v259 = vmax.f32 %v48, %v49
    %260 = vmax.xlane.f32.xlu0 %v259
    %v261 = vpop.xlane.xlu0 %260
    %v262 = vmax.f32 %v50, %v51
    %263 = vmax.xlane.f32.xlu0 %v262
    %v264 = vpop.xlane.xlu0 %263
    %v265 = vmax.f32 %v52, %v53
    %266 = vmax.xlane.f32.xlu0 %v265
    %v267 = vpop.xlane.xlu0 %266
    %v284 = vlaneseq
    %v285 = vshrl.u32 %v284, 7
    %v286 = vsub.s32 %v120, %v285
    %v287 = vrot.slane %v222, %v286
    %v288 = vlaneseq
    %v289 = vshrl.u32 %v288, 7
    %v290 = vsub.s32 %v125, %v289
    %v291 = vrot.slane %v225, %v290
    %v292 = vsel %vm130, %v291, %v287
    %v293 = vlaneseq
    %v294 = vshrl.u32 %v293, 7
    %v295 = vsub.s32 %v132, %v294
    %v296 = vrot.slane %v228, %v295
    %v297 = vsel %vm137, %v296, %v292
    %v298 = vlaneseq
    %v299 = vshrl.u32 %v298, 7
    %v300 = vsub.s32 %v139, %v299
    %v301 = vrot.slane %v231, %v300
    %v302 = vsel %vm144, %v301, %v297
    %v303 = vlaneseq
    %v304 = vshrl.u32 %v303, 7
    %v305 = vsub.s32 %v146, %v304
    %v306 = vrot.slane %v234, %v305
    %v307 = vsel %vm151, %v306, %v302
    %v308 = vlaneseq
    %v309 = vshrl.u32 %v308, 7
    %v310 = vsub.s32 %v153, %v309
    %v311 = vrot.slane %v237, %v310
    %v312 = vsel %vm158, %v311, %v307
    %v313 = vlaneseq
    %v314 = vshrl.u32 %v313, 7
    %v315 = vsub.s32 %v160, %v314
    %v316 = vrot.slane %v240, %v315
    %v317 = vsel %vm165, %v316, %v312
    %v318 = vlaneseq
    %v319 = vshrl.u32 %v318, 7
    %v320 = vsub.s32 %v167, %v319
    %v321 = vrot.slane %v243, %v320
    %v322 = vsel %vm172, %v321, %v317
    %v323 = vlaneseq
    %v324 = vshrl.u32 %v323, 7
    %v325 = vsub.s32 %v120, %v324
    %v326 = vrot.slane %v246, %v325
    %v327 = vlaneseq
    %v328 = vshrl.u32 %v327, 7
    %v329 = vsub.s32 %v125, %v328
    %v330 = vrot.slane %v249, %v329
    %v331 = vsel %vm130, %v330, %v326
    %v332 = vlaneseq
    %v333 = vshrl.u32 %v332, 7
    %v334 = vsub.s32 %v132, %v333
    %v335 = vrot.slane %v252, %v334
    %v336 = vsel %vm137, %v335, %v331
    %v337 = vlaneseq
    %v338 = vshrl.u32 %v337, 7
    %v339 = vsub.s32 %v139, %v338
    %v340 = vrot.slane %v255, %v339
    %v341 = vsel %vm144, %v340, %v336
    %v342 = vlaneseq
    %v343 = vshrl.u32 %v342, 7
    %v344 = vsub.s32 %v146, %v343
    %v345 = vrot.slane %v258, %v344
    %v346 = vsel %vm151, %v345, %v341
    %v347 = vlaneseq
    %v348 = vshrl.u32 %v347, 7
    %v349 = vsub.s32 %v153, %v348
    %v350 = vrot.slane %v261, %v349
    %v351 = vsel %vm158, %v350, %v346
    %v352 = vlaneseq
    %v353 = vshrl.u32 %v352, 7
    %v354 = vsub.s32 %v160, %v353
    %v355 = vrot.slane %v264, %v354
    %v356 = vsel %vm165, %v355, %v351
    %v357 = vlaneseq
    %v358 = vshrl.u32 %v357, 7
    %v359 = vsub.s32 %v167, %v358
    %v360 = vrot.slane %v267, %v359
    %v361 = vsel %vm172, %v360, %v356
    %v362 = vsel %vm213, %v361, %v322
    %v364 = vmax.f32 %v219, %v362
    %365 = vst.msk [vmem:[#allocation3] sm:$0x3] %vm217, %v364
    // Predicated region
    $region18: #{channel_attention_forward.1} parent=1 // pred_check
      %p366 = pneg %p15
    $region19: #{channel_attention_forward.1} parent=1 // pred_check_branch
      %368 = sbr.rel (%p366) target = $region21
    $region20: #{channel_attention_forward.1} parent=1 // pred_region
      %v369 = vld [vmem:[#allocation2] sm:$0x3]
      %v370 = vmul.f32 %v369, 0.00390625
      %v371 = vld [vmem:[#allocation3] sm:$0x3]
      %v373 = vrot.slane %v371, 6
      %vm375 = vcmask 1041408
      %v376 = vsel %vm375, %v370, %v373
      %v377 = vld [vmem:[%s1] sm:$0xff]
      %v378 = vld [vmem:[%s1 + $0x8] sm:$0xff]
      %v379 = vld [vmem:[%s1 + $0x10] sm:$0xff]
      %v380 = vld [vmem:[%s1 + $0x18] sm:$0xff]
      %v381 = vld [vmem:[%s1 + $0x20] sm:$0xff]
      %v382 = vld [vmem:[%s1 + $0x28] sm:$0xff]
      %v383 = vld [vmem:[%s1 + $0x30] sm:$0xff]
      %v384 = vld [vmem:[%s1 + $0x38] sm:$0xff]
      %vm385 = vcmask 523264
      %v387 = vsel %vm385, %v376, 0
      %389 = vmatprep.subr.mxu0 0.0
      %390 = vmatpush1.msra.mxu0 %v377
      %391 = vmatprep.subr.mxu0 0.0
      %392 = vmatpush1.msra.mxu0 %v378
      %393 = vmatprep.subr.mxu0 0.0
      %394 = vmatpush1.msra.mxu0 %v379
      %395 = vmatprep.subr.mxu0 0.0
      %396 = vmatpush1.msra.mxu0 %v380
      %397 = vmatprep.subr.mxu0 0.0
      %398 = vmatpush1.msra.mxu0 %v381
      %399 = vmatprep.subr.mxu0 0.0
      %400 = vmatpush1.msra.mxu0 %v382
      %401 = vmatprep.subr.mxu0 0.0
      %402 = vmatpush1.msra.mxu0 %v383
      %403 = vmatprep.subr.mxu0 0.0
      %404 = vmatpush1.msra.mxu0 %v384
      %405 = vmatprep.subr.mxu0 0.0
      %406 = vmatpush1.msra.mxu0 0.0
      %407 = vmatprep.subr.mxu0 0.0
      %408 = vmatpush1.msra.mxu0 0.0
      %409 = vmatprep.subr.mxu0 0.0
      %410 = vmatpush1.msra.mxu0 0.0
      %411 = vmatprep.subr.mxu0 0.0
      %412 = vmatpush1.msra.mxu0 0.0
      %413 = vmatprep.subr.mxu0 0.0
      %414 = vmatpush1.msra.mxu0 0.0
      %415 = vmatprep.subr.mxu0 0.0
      %416 = vmatpush1.msra.mxu0 0.0
      %417 = vmatprep.subr.mxu0 0.0
      %418 = vmatpush1.msra.mxu0 0.0
      %419 = vmatprep.subr.mxu0 0.0
      %420 = vmatpush1.msra.mxu0 0.0
      %421 = vmatprep.subr.mxu0 0.0
      %422 = vmatpush1.msra.mxu0 0.0
      %423 = vmatprep.subr.mxu0 0.0
      %424 = vmatpush1.msra.mxu0 0.0
      %425 = vmatprep.subr.mxu0 0.0
      %426 = vmatpush1.msra.mxu0 0.0
      %427 = vmatprep.subr.mxu0 0.0
      %428 = vmatpush1.msra.mxu0 0.0
      %429 = vmatprep.subr.mxu0 0.0
      %430 = vmatpush1.msra.mxu0 0.0
      %431 = vmatprep.subr.mxu0 0.0
      %432 = vmatpush1.msra.mxu0 0.0
      %433 = vmatprep.subr.mxu0 0.0
      %434 = vmatpush1.msra.mxu0 0.0
      %435 = vmatprep.subr.mxu0 0.0
      %436 = vmatpush1.msra.mxu0 0.0
      %437 = vmatprep.subr.mxu0 0.0
      %438 = vmatpush1.msra.mxu0 0.0
      %439 = vmatprep.subr.mxu0 0.0
      %440 = vmatpush1.msra.mxu0 0.0
      %441 = vmatprep.subr.mxu0 0.0
      %442 = vmatpush1.msra.mxu0 0.0
      %443 = vmatprep.subr.mxu0 0.0
      %444 = vmatpush1.msra.mxu0 0.0
      %445 = vmatprep.subr.mxu0 0.0
      %446 = vmatpush1.msra.mxu0 0.0
      %447 = vmatprep.subr.mxu0 0.0
      %448 = vmatpush1.msra.mxu0 0.0
      %449 = vmatprep.subr.mxu0 0.0
      %450 = vmatpush1.msra.mxu0 0.0
      %451 = vmatprep.subr.mxu0 0.0
      %452 = vmatpush1.msra.mxu0 0.0
      %453 = vmatprep.mubr.f32.mxu0 0.0
      %454 = vmatmul.mubr.f32.gmra.mrb[0].mxu0 %v387
      %v455 = vpop.f32.mrb[0].mxu0
      %v456 = vadd.f32 0.0, %v455
      %v457 = vpop.f32.mrb[0].mxu0
      %458 = vdwg.mxu0
      %v459 = vmax.f32 %v456, 0.0
      %v460 = vld [vmem:[%s2] sm:$0xff]
      %vm461 = vcmask 64512
      %v463 = vsel %vm461, %v459, 0
      %465 = vmatprep.subr.mxu0 0.0
      %466 = vmatpush1.msra.mxu0 %v460
      %467 = vmatprep.subr.mxu0 0.0
      %468 = vmatpush1.msra.mxu0 0.0
      %469 = vmatprep.subr.mxu0 0.0
      %470 = vmatpush1.msra.mxu0 0.0
      %471 = vmatprep.subr.mxu0 0.0
      %472 = vmatpush1.msra.mxu0 0.0
      %473 = vmatprep.subr.mxu0 0.0
      %474 = vmatpush1.msra.mxu0 0.0
      %475 = vmatprep.subr.mxu0 0.0
      %476 = vmatpush1.msra.mxu0 0.0
      %477 = vmatprep.subr.mxu0 0.0
      %478 = vmatpush1.msra.mxu0 0.0
      %479 = vmatprep.subr.mxu0 0.0
      %480 = vmatpush1.msra.mxu0 0.0
      %481 = vmatprep.subr.mxu0 0.0
      %482 = vmatpush1.msra.mxu0 0.0
      %483 = vmatprep.subr.mxu0 0.0
      %484 = vmatpush1.msra.mxu0 0.0
      %485 = vmatprep.subr.mxu0 0.0
      %486 = vmatpush1.msra.mxu0 0.0
      %487 = vmatprep.subr.mxu0 0.0
      %488 = vmatpush1.msra.mxu0 0.0
      %489 = vmatprep.subr.mxu0 0.0
      %490 = vmatpush1.msra.mxu0 0.0
      %491 = vmatprep.subr.mxu0 0.0
      %492 = vmatpush1.msra.mxu0 0.0
      %493 = vmatprep.subr.mxu0 0.0
      %494 = vmatpush1.msra.mxu0 0.0
      %495 = vmatprep.subr.mxu0 0.0
      %496 = vmatpush1.msra.mxu0 0.0
      %497 = vmatprep.subr.mxu0 0.0
      %498 = vmatpush1.msra.mxu0 0.0
      %499 = vmatprep.subr.mxu0 0.0
      %500 = vmatpush1.msra.mxu0 0.0
      %501 = vmatprep.subr.mxu0 0.0
      %502 = vmatpush1.msra.mxu0 0.0
      %503 = vmatprep.subr.mxu0 0.0
      %504 = vmatpush1.msra.mxu0 0.0
      %505 = vmatprep.subr.mxu0 0.0
      %506 = vmatpush1.msra.mxu0 0.0
      %507 = vmatprep.subr.mxu0 0.0
      %508 = vmatpush1.msra.mxu0 0.0
      %509 = vmatprep.subr.mxu0 0.0
      %510 = vmatpush1.msra.mxu0 0.0
      %511 = vmatprep.subr.mxu0 0.0
      %512 = vmatpush1.msra.mxu0 0.0
      %513 = vmatprep.subr.mxu0 0.0
      %514 = vmatpush1.msra.mxu0 0.0
      %515 = vmatprep.subr.mxu0 0.0
      %516 = vmatpush1.msra.mxu0 0.0
      %517 = vmatprep.subr.mxu0 0.0
      %518 = vmatpush1.msra.mxu0 0.0
      %519 = vmatprep.subr.mxu0 0.0
      %520 = vmatpush1.msra.mxu0 0.0
      %521 = vmatprep.subr.mxu0 0.0
      %522 = vmatpush1.msra.mxu0 0.0
      %523 = vmatprep.subr.mxu0 0.0
      %524 = vmatpush1.msra.mxu0 0.0
      %525 = vmatprep.subr.mxu0 0.0
      %526 = vmatpush1.msra.mxu0 0.0
      %527 = vmatprep.subr.mxu0 0.0
      %528 = vmatpush1.msra.mxu0 0.0
      %529 = vmatprep.mubr.f32.mxu0 0.0
      %530 = vmatmul.mubr.f32.gmra.mrb[0].mxu0 %v463
      %v531 = vpop.f32.mrb[0].mxu0
      %v532 = vadd.f32 0.0, %v531
      %v533 = vpop.f32.mrb[0].mxu0
      %534 = vdwg.mxu0
      %v536 = vrot.slane %v532, 2
      %v538 = vadd.f32 %v532, %v536
      %v539 = vxor.u32 %v538, 2147483648
      %v540 = vmul.f32 %v539, 1.442695
      %v541 = vpow.pop %v540
      %v542 = vadd.f32 %v541, 1.0
      %v543 = vrcp.pop %v542
      %v544 = vmul.f32 1.0, %v543
      %545 = vst.msk [vmem:[#allocation4] sm:$0x3] %vm217, %v544
    $region21: #{channel_attention_forward.1} parent=1 // pred_fallthru
      _
    // Predicated region
    $region22: #{channel_attention_forward.1} parent=1 // pred_check
      _
    $region23: #{channel_attention_forward.1} parent=1 // pred_check_branch
      %547 = sbr.rel (0) target = $region25
    $region24: #{channel_attention_forward.1} parent=1 // pred_region
      %s549 = ssub.s32 32, 32
      %550 = vsyncadd [#allocation5], %s549
      %s552 = sshll.u32 [#allocation4], 4
      %s553 = int_to_ptr.vmem [resolvable:$true] %s552
      %555 = dma.vmem_to_hbm [thread:$0]  %s553, 32, %s3, [#allocation5]
    $region25: #{channel_attention_forward.1} parent=1 // pred_fallthru
      _
    // Predicated region
    $region26: #{channel_attention_forward.1} parent=1 // pred_check
      _
    $region27: #{channel_attention_forward.1} parent=1 // pred_check_branch
      %557 = sbr.rel (0) target = $region29
    $region28: #{channel_attention_forward.1} parent=1 // pred_region
      %558 = dma.done [#allocation5], 32
    $region29: #{channel_attention_forward.1} parent=1 // pred_fallthru
      _
    %559 = vsyncpa [#allocation5], 1

</llo_original>
